<compile_context>
chip_gen: v5e
topology: v5e:2x2
jax: 0.10.0
libtpu: 0.0.40
codegen_flags: <defaults>
</compile_context>

<pallas_src>
import jax
import jax.numpy as jnp
from jax import lax
from jax.experimental import pallas as pl
from jax.experimental.pallas import tpu as pltpu


def _vmem_spec():
    return pl.BlockSpec(memory_space=pltpu.MemorySpace.VMEM)


# ----------------------------- fused Pallas kernel ----------------------------

def encoder_fused_kernel(patches_ref, w1_ref, b1_ref, w2_ref, encs_ref, encs_d_ref):
    """conv1(4x4/s4,+bias)+ReLU -> conv2(2x2/s2)+Sigmoid -> 0.5 threshold, fused.

    patches: (N, 4*K1)  one row per conv2 output position (b, h2, w2); the row
             holds the four conv1 sub-patches (dh, dw) of its 8x8 input block,
             each in (kh, kw, cin) order.
    w1:      (4*K1, 128) block-diagonal conv1 weight (4 copies of (K1, 32)).
    b1:      (1, 128)    conv1 bias tiled over the 4 sub-positions.
    w2:      (128, Ce)   conv2 weight in (kh, kw, cin) x cout layout (no bias).
    """
    h1 = jnp.dot(patches_ref[...], w1_ref[...], preferred_element_type=jnp.float32)
    h1 = jnp.maximum(h1 + b1_ref[...], 0.0)                             # conv1 bias + ReLU
    z = jnp.dot(h1, w2_ref[...], preferred_element_type=jnp.float32)    # conv2 (bias=False)
    encs = 1.0 / (1.0 + jnp.exp(-z))                                    # SIGMOID (EUP)
    encs_ref[...] = encs
    encs_d_ref[...] = jnp.where(encs > 0.5, 1.0, 0.0)                   # STEThresh forward


# ------------------------------ parameter prep --------------------------------

def init_params(key, chan_in, chan_enc):
    k1, k2, k3 = jax.random.split(key, 3)
    scale = 0.5
    return {
        "conv1_w": scale * jax.random.normal(k1, (32, chan_in, 4, 4), jnp.float32),  # OIHW
        "conv1_b": scale * jax.random.normal(k2, (32,), jnp.float32),
        "conv2_w": scale * jax.random.normal(k3, (chan_enc, 32, 2, 2), jnp.float32),  # OIHW, no bias
    }


def preprocess_params(params):
    """Hoisted out of the forward path: run once at parameter-load time."""
    w1, b1, w2 = params["conv1_w"], params["conv1_b"], params["conv2_w"]
    c1_out, c_in, kh1, kw1 = w1.shape            # (32, chan_in, 4, 4)
    c2_out, c2_in, kh2, kw2 = w2.shape           # (chan_enc, 32, 2, 2)
    assert c2_in == c1_out and (kh1, kw1, kh2, kw2) == (4, 4, 2, 2)
    k1 = kh1 * kw1 * c_in
    # OIHW -> (kh, kw, cin) x cout GEMM layout.
    w1_mat = jnp.transpose(w1, (2, 3, 1, 0)).reshape(k1, c1_out)
    # Block-diagonal expansion: one lane-dense GEMM evaluates the four conv1
    # applications inside each 8x8 input block and emits conv2's im2col directly.
    w1_big = jnp.kron(jnp.eye(kh2 * kw2, dtype=jnp.float32), w1_mat)       # (4*K1, 128)
    b1_big = jnp.tile(b1, kh2 * kw2).reshape(1, kh2 * kw2 * c1_out)        # (1, 128)
    w2_mat = jnp.transpose(w2, (2, 3, 1, 0)).reshape(kh2 * kw2 * c2_in, c2_out)  # (128, Ce)
    return {"w1_big": w1_big, "b1_big": b1_big, "w2_mat": w2_mat}


# --------------------------------- forward ------------------------------------

def _build_patches(x_nchw):
    """(B, C, H, W) -> (B*H2*W2, 2*2*4*4*C). Pure permutation (kernel == stride)."""
    B, C, H, W = x_nchw.shape
    H2, W2 = H // 8, W // 8
    x8 = x_nchw.reshape(B, C, H2, 2, 4, W2, 2, 4)
    p = jnp.transpose(x8, (0, 2, 5, 3, 6, 4, 7, 1))   # (B, h2, w2, dh, dw, kh, kw, C)
    return p.reshape(B * H2 * W2, 2 * 2 * 4 * 4 * C)


def encoder_forward(prep, states):
    """Returns (encs, encs_d) exactly like Encoder.forward (NCHW flatten order)."""
    x = states.astype(jnp.float32)
    B, C, H, W = x.shape
    H2, W2 = H // 8, W // 8
    Ce = prep["w2_mat"].shape[1]
    N = B * H2 * W2

    patches = _build_patches(x)
    encs_rows, encs_d_rows = pl.pallas_call(
        encoder_fused_kernel,
        out_shape=(jax.ShapeDtypeStruct((N, Ce), jnp.float32),
                   jax.ShapeDtypeStruct((N, Ce), jnp.float32)),
        in_specs=[_vmem_spec(), _vmem_spec(), _vmem_spec(), _vmem_spec()],
        out_specs=(_vmem_spec(), _vmem_spec()),
    )(patches, prep["w1_big"], prep["b1_big"], prep["w2_mat"])

    def to_nchw_flat(a):  # layout plumbing only: (b,h2,w2,c) rows -> NCHW flatten
        return jnp.transpose(a.reshape(B, H2, W2, Ce), (0, 3, 1, 2)).reshape(B, Ce * H2 * W2)

    return to_nchw_flat(encs_rows), to_nchw_flat(encs_d_rows)


# ------------------------- pure-JAX reference (sanity) -------------------------

def encoder_reference(params, states):
    x = states.astype(jnp.float32)
    dn = ("NCHW", "OIHW", "NCHW")
    h = lax.conv_general_dilated(x, params["conv1_w"], (4, 4), "VALID",
                                 dimension_numbers=dn, precision=lax.Precision.HIGHEST)
    h = jnp.maximum(h + params["conv1_b"][None, :, None, None], 0.0)
    z = lax.conv_general_dilated(h, params["conv2_w"], (2, 2), "VALID",
                                 dimension_numbers=dn, precision=lax.Precision.HIGHEST)
    encs = jax.nn.sigmoid(z).reshape(z.shape[0], -1)
    return encs, (encs > 0.5).astype(jnp.float32)


# ----------------------------------- main --------------------------------------

if __name__ == "__main__":
    chan_in, chan_enc = 4, 6
    batch, H, W = 2, 16, 16          # 16 -> conv(4,s4) -> 4 -> conv(2,s2) -> 2

    key = jax.random.PRNGKey(0)
    kp, kx = jax.random.split(key)
    params = init_params(kp, chan_in, chan_enc)
    prep = preprocess_params(params)   # weight reshapes hoisted out of the forward

    states = jax.random.uniform(kx, (batch, chan_in, H, W), jnp.float32)

    fwd = jax.jit(encoder_forward)
    encs, encs_d = fwd(prep, states)
    jax.block_until_ready((encs, encs_d))

    H2, W2 = H // 8, W // 8
    assert encs.shape == (batch, chan_enc * H2 * W2), encs.shape
    assert encs_d.shape == encs.shape, encs_d.shape
    assert encs.dtype == jnp.float32 and encs_d.dtype == jnp.float32
    assert bool(jnp.all(jnp.isfinite(encs)))
    assert bool(jnp.all((encs_d == 0.0) | (encs_d == 1.0)))
    assert bool(jnp.all(encs_d == (encs > 0.5).astype(jnp.float32)))

    # Sanity check against an independent lax.conv reference (loose tol for MXU precision).
    ref_encs, _ = encoder_reference(params, states)
    max_err = float(jnp.max(jnp.abs(encs - ref_encs)))
    assert max_err < 5e-2, f"mismatch vs reference: {max_err}"

    print("KERNEL_OK")
</pallas_src>

<mosaic_0001>
module attributes {stable_mosaic.version = 11 : i64} {
  func.func @encoder_fused_kernel(%arg0: memref<8x256xf32, #tpu.memory_space<vmem>>, %arg1: memref<256x128xf32, #tpu.memory_space<vmem>>, %arg2: memref<1x128xf32, #tpu.memory_space<vmem>>, %arg3: memref<128x6xf32, #tpu.memory_space<vmem>>, %arg4: memref<8x6xf32, #tpu.memory_space<vmem>>, %arg5: memref<8x6xf32, #tpu.memory_space<vmem>>) attributes {dimension_semantics = [], scalar_prefetch = 0 : i64, scratch_operands = 0 : i64, tpu.core_type = #tpu.core_type<tc>} {
    %c0 = arith.constant 0 : index
    %c0_0 = arith.constant 0 : index
    %0 = vector.load %arg0[%c0, %c0_0] : memref<8x256xf32, #tpu.memory_space<vmem>>, vector<8x256xf32>
    %c0_1 = arith.constant 0 : index
    %c0_2 = arith.constant 0 : index
    %1 = vector.load %arg1[%c0_1, %c0_2] : memref<256x128xf32, #tpu.memory_space<vmem>>, vector<256x128xf32>
    %cst = arith.constant dense<0.000000e+00> : vector<8x128xf32>
    %2 = tpu.matmul %0, %1, %cst {dimension_numbers = #tpu.dot_dimension_numbers<[1], [0], [0], [1], [0, 0, 1, 1], [], []>} : vector<8x256xf32>, vector<256x128xf32>, vector<8x128xf32> -> vector<8x128xf32>
    %c0_3 = arith.constant 0 : index
    %c0_4 = arith.constant 0 : index
    %3 = vector.load %arg2[%c0_3, %c0_4] : memref<1x128xf32, #tpu.memory_space<vmem>>, vector<1x128xf32>
    %4 = vector.broadcast %3 : vector<1x128xf32> to vector<8x128xf32>
    %5 = arith.addf %2, %4 : vector<8x128xf32>
    %cst_5 = arith.constant 0.000000e+00 : f32
    %6 = vector.broadcast %cst_5 : f32 to vector<8x128xf32>
    %7 = arith.maximumf %5, %6 : vector<8x128xf32>
    %c0_6 = arith.constant 0 : index
    %c0_7 = arith.constant 0 : index
    %8 = vector.load %arg3[%c0_6, %c0_7] : memref<128x6xf32, #tpu.memory_space<vmem>>, vector<128x6xf32>
    %cst_8 = arith.constant dense<0.000000e+00> : vector<8x6xf32>
    %9 = tpu.matmul %7, %8, %cst_8 {dimension_numbers = #tpu.dot_dimension_numbers<[1], [0], [0], [1], [0, 0, 1, 1], [], []>} : vector<8x128xf32>, vector<128x6xf32>, vector<8x6xf32> -> vector<8x6xf32>
    %cst_9 = arith.constant 0.000000e+00 : f32
    %10 = vector.broadcast %cst_9 : f32 to vector<8x6xf32>
    %11 = arith.subf %10, %9 : vector<8x6xf32>
    %12 = math.exp %11 : vector<8x6xf32>
    %cst_10 = arith.constant 1.000000e+00 : f32
    %13 = vector.broadcast %cst_10 : f32 to vector<8x6xf32>
    %14 = arith.addf %13, %12 : vector<8x6xf32>
    %cst_11 = arith.constant 1.000000e+00 : f32
    %15 = vector.broadcast %cst_11 : f32 to vector<8x6xf32>
    %16 = arith.divf %15, %14 : vector<8x6xf32>
    %c0_12 = arith.constant 0 : index
    %c0_13 = arith.constant 0 : index
    %17 = vector.load %arg4[%c0_12, %c0_13] : memref<8x6xf32, #tpu.memory_space<vmem>>, vector<8x6xf32>
    tpu.vector_store %arg4[%c0_12, %c0_13], %16 {strides = array<i32>} : memref<8x6xf32, #tpu.memory_space<vmem>>, vector<8x6xf32>,
    %cst_14 = arith.constant 5.000000e-01 : f32
    %18 = vector.broadcast %cst_14 : f32 to vector<8x6xf32>
    %19 = arith.cmpf ogt, %16, %18 : vector<8x6xf32>
    %cst_15 = arith.constant 1.000000e+00 : f32
    %cst_16 = arith.constant 0.000000e+00 : f32
    %20 = vector.broadcast %cst_15 : f32 to vector<8x6xf32>
    %21 = vector.broadcast %cst_16 : f32 to vector<8x6xf32>
    %22 = arith.select %19, %20, %21 : vector<8x6xi1>, vector<8x6xf32>
    %c0_17 = arith.constant 0 : index
    %c0_18 = arith.constant 0 : index
    %23 = vector.load %arg5[%c0_17, %c0_18] : memref<8x6xf32, #tpu.memory_space<vmem>>, vector<8x6xf32>
    tpu.vector_store %arg5[%c0_17, %c0_18], %22 {strides = array<i32>} : memref<8x6xf32, #tpu.memory_space<vmem>>, vector<8x6xf32>,
    return
  }
}

</mosaic_0001>

<llo_original>
// kernel: encoder_forward.1
$region0: #{encoder_forward.1}
  #allocation0 [shape = 'u32[]', space=smem, size = 0x4, offset = 0x4, fixed_abs, tag = 'smem constant byte address 0x4 - core index']
  #allocation1 [shape = 'u32[72,128]{1,0:T(1,128)}', space=vmem, size = 0x9000, scoped, tag = 'internal scratch']
  %s0 = inlined_call_operand.vmem [shape: f32[8,256], index: 0, kind: input, shape index: {}]
  %s1 = inlined_call_operand.vmem [shape: f32[256,128], index: 1, kind: input, shape index: {}]
  %s2 = inlined_call_operand.vmem [shape: f32[1,128], index: 2, kind: input, shape index: {}]
  %s3 = inlined_call_operand.vmem [shape: f32[128,6], index: 3, kind: input, shape index: {}]
  %s4 = inlined_call_operand.vmem [shape: f32[8,6], index: 4, kind: output, shape index: {0}]
  %s5 = inlined_call_operand.vmem [shape: f32[8,6], index: 5, kind: output, shape index: {1}]
  %6 = xla_tuple %s4, %s5
  %s7 = sld [smem:[#allocation0]]
  $region34: #{encoder_forward.1} parent=0
    _
  %s9 = ssub.s32 1, %s7
  %s10 = scalar_select 0, %s9, %s7
  // Predicated region
  $region2: #{encoder_forward.1} parent=0 // pred_check
    _
  $region3: #{encoder_forward.1} parent=0 // pred_check_branch
    %12 = sbr.rel (0) target = $region5
  $region4: #{encoder_forward.1} parent=0 // pred_region
    _
  $region5: #{encoder_forward.1} parent=0 // pred_fallthru
    _
  // Predicated region
  $region6: #{encoder_forward.1} parent=0 // pred_check
    _
  $region7: #{encoder_forward.1} parent=0 // pred_check_branch
    %14 = sbr.rel (0) target = $region9
  $region8: #{encoder_forward.1} parent=0 // pred_region
    _
  $region9: #{encoder_forward.1} parent=0 // pred_fallthru
    _
  // Predicated region
  $region10: #{encoder_forward.1} parent=0 // pred_check
    _
  $region11: #{encoder_forward.1} parent=0 // pred_check_branch
    %16 = sbr.rel (0) target = $region13
  $region12: #{encoder_forward.1} parent=0 // pred_region
    _
  $region13: #{encoder_forward.1} parent=0 // pred_fallthru
    _
  // Predicated region
  $region14: #{encoder_forward.1} parent=0 // pred_check
    _
  $region15: #{encoder_forward.1} parent=0 // pred_check_branch
    %18 = sbr.rel (0) target = $region17
  $region16: #{encoder_forward.1} parent=0 // pred_region
    _
  $region17: #{encoder_forward.1} parent=0 // pred_fallthru
    _
  %v19 = vld [vmem:[%s0] sm:$0xff]
  %v20 = vld [vmem:[%s0 + $0x8] sm:$0xff]
  %v21 = vld [vmem:[%s1] sm:$0xff]
  %v22 = vld [vmem:[%s1 + $0x8] sm:$0xff]
  %v23 = vld [vmem:[%s1 + $0x10] sm:$0xff]
  %v24 = vld [vmem:[%s1 + $0x18] sm:$0xff]
  %v25 = vld [vmem:[%s1 + $0x20] sm:$0xff]
  %v26 = vld [vmem:[%s1 + $0x28] sm:$0xff]
  %v27 = vld [vmem:[%s1 + $0x30] sm:$0xff]
  %v28 = vld [vmem:[%s1 + $0x38] sm:$0xff]
  %v29 = vld [vmem:[%s1 + $0x40] sm:$0xff]
  %v30 = vld [vmem:[%s1 + $0x48] sm:$0xff]
  %v31 = vld [vmem:[%s1 + $0x50] sm:$0xff]
  %v32 = vld [vmem:[%s1 + $0x58] sm:$0xff]
  %v33 = vld [vmem:[%s1 + $0x60] sm:$0xff]
  %v34 = vld [vmem:[%s1 + $0x68] sm:$0xff]
  %v35 = vld [vmem:[%s1 + $0x70] sm:$0xff]
  %v36 = vld [vmem:[%s1 + $0x78] sm:$0xff]
  %v37 = vld [vmem:[%s1 + $0x80] sm:$0xff]
  %v38 = vld [vmem:[%s1 + $0x88] sm:$0xff]
  %v39 = vld [vmem:[%s1 + $0x90] sm:$0xff]
  %v40 = vld [vmem:[%s1 + $0x98] sm:$0xff]
  %v41 = vld [vmem:[%s1 + $0xa0] sm:$0xff]
  %v42 = vld [vmem:[%s1 + $0xa8] sm:$0xff]
  %v43 = vld [vmem:[%s1 + $0xb0] sm:$0xff]
  %v44 = vld [vmem:[%s1 + $0xb8] sm:$0xff]
  %v45 = vld [vmem:[%s1 + $0xc0] sm:$0xff]
  %v46 = vld [vmem:[%s1 + $0xc8] sm:$0xff]
  %v47 = vld [vmem:[%s1 + $0xd0] sm:$0xff]
  %v48 = vld [vmem:[%s1 + $0xd8] sm:$0xff]
  %v49 = vld [vmem:[%s1 + $0xe0] sm:$0xff]
  %v50 = vld [vmem:[%s1 + $0xe8] sm:$0xff]
  %v51 = vld [vmem:[%s1 + $0xf0] sm:$0xff]
  %v52 = vld [vmem:[%s1 + $0xf8] sm:$0xff]
  %v53 = vld [vmem:[%s2] sm:$0x1]
  %v55 = vperm.slane %v53, 0
  %57 = vmatpush.msra.mxu0 %v36
  %58 = vmatpush.msra.mxu0 %v35
  %59 = vmatpush.msra.mxu0 %v34
  %60 = vmatpush.msra.mxu0 %v33
  %61 = vmatpush.msra.mxu0 %v32
  %62 = vmatpush.msra.mxu0 %v31
  %63 = vmatpush.msra.mxu0 %v30
  %64 = vmatpush.msra.mxu0 %v29
  %65 = vmatpush.msra.mxu0 %v28
  %66 = vmatpush.msra.mxu0 %v27
  %67 = vmatpush.msra.mxu0 %v26
  %68 = vmatpush.msra.mxu0 %v25
  %69 = vmatpush.msra.mxu0 %v24
  %70 = vmatpush.msra.mxu0 %v23
  %71 = vmatpush.msra.mxu0 %v22
  %72 = vmatpush.msra.mxu0 %v21
  %73 = vmatmul.f32.gmra.mxu0 %v19
  %v74 = vpop.f32.mrf.mxu0
  %v75 = vadd.f32 %v55, %v74
  %76 = vdwg.mxu0
  %77 = vmatpush.msra.mxu0 %v52
  %78 = vmatpush.msra.mxu0 %v51
  %79 = vmatpush.msra.mxu0 %v50
  %80 = vmatpush.msra.mxu0 %v49
  %81 = vmatpush.msra.mxu0 %v48
  %82 = vmatpush.msra.mxu0 %v47
  %83 = vmatpush.msra.mxu0 %v46
  %84 = vmatpush.msra.mxu0 %v45
  %85 = vmatpush.msra.mxu0 %v44
  %86 = vmatpush.msra.mxu0 %v43
  %87 = vmatpush.msra.mxu0 %v42
  %88 = vmatpush.msra.mxu0 %v41
  %89 = vmatpush.msra.mxu0 %v40
  %90 = vmatpush.msra.mxu0 %v39
  %91 = vmatpush.msra.mxu0 %v38
  %92 = vmatpush.msra.mxu0 %v37
  %93 = vmatmul.f32.gmra.mxu0 %v20
  %v94 = vpop.f32.mrf.mxu0
  %v95 = vadd.f32 %v75, %v94
  %96 = vdwg.mxu0
  %v97 = vmax.f32 %v95, 0.0
  %v98 = vld [vmem:[%s3] sm:$0xff]
  %v99 = vld [vmem:[%s3 + $0x8] sm:$0xff]
  %v100 = vld [vmem:[%s3 + $0x10] sm:$0xff]
  %v101 = vld [vmem:[%s3 + $0x18] sm:$0xff]
  %v102 = vld [vmem:[%s3 + $0x20] sm:$0xff]
  %v103 = vld [vmem:[%s3 + $0x28] sm:$0xff]
  %v104 = vld [vmem:[%s3 + $0x30] sm:$0xff]
  %v105 = vld [vmem:[%s3 + $0x38] sm:$0xff]
  %v106 = vld [vmem:[%s3 + $0x40] sm:$0xff]
  %v107 = vld [vmem:[%s3 + $0x48] sm:$0xff]
  %v108 = vld [vmem:[%s3 + $0x50] sm:$0xff]
  %v109 = vld [vmem:[%s3 + $0x58] sm:$0xff]
  %v110 = vld [vmem:[%s3 + $0x60] sm:$0xff]
  %v111 = vld [vmem:[%s3 + $0x68] sm:$0xff]
  %v112 = vld [vmem:[%s3 + $0x70] sm:$0xff]
  %v113 = vld [vmem:[%s3 + $0x78] sm:$0xff]
  %114 = vmatpush.msra.mxu0 %v113
  %115 = vmatpush.msra.mxu0 %v112
  %116 = vmatpush.msra.mxu0 %v111
  %117 = vmatpush.msra.mxu0 %v110
  %118 = vmatpush.msra.mxu0 %v109
  %119 = vmatpush.msra.mxu0 %v108
  %120 = vmatpush.msra.mxu0 %v107
  %121 = vmatpush.msra.mxu0 %v106
  %122 = vmatpush.msra.mxu0 %v105
  %123 = vmatpush.msra.mxu0 %v104
  %124 = vmatpush.msra.mxu0 %v103
  %125 = vmatpush.msra.mxu0 %v102
  %126 = vmatpush.msra.mxu0 %v101
  %127 = vmatpush.msra.mxu0 %v100
  %128 = vmatpush.msra.mxu0 %v99
  %129 = vmatpush.msra.mxu0 %v98
  %130 = vmatmul.f32.gmra.mxu0 %v97
  %v131 = vpop.f32.mrf.mxu0
  %v132 = vadd.f32 0.0, %v131
  %133 = vdwg.mxu0
  %v134 = vsub.f32 0.0, %v132
  %v135 = vmul.f32 %v134, 1.442695
  %v136 = vpow.pop %v135
  %v137 = vadd.f32 %v136, 1.0
  %v138 = vrcp.pop %v137
  %v139 = vmul.f32 %v137, %v138
  %v140 = vsub.f32 1.0, %v139
  %v141 = vmul.f32 %v138, %v140
  %v142 = vadd.f32 %v138, %v141
  %vm143 = vweird.f32 %v137
  %vm144 = vweird.f32 %v138
  %vm145 = vmor %vm143, %vm144
  %v146 = vsel %vm145, %v138, %v142
  %v147 = vand.u32 2147483647, %v137
  %vm148 = vcmp.eq.f32.partialorder %v147, 8.507059e+37
  %v149 = vand.u32 %v137, 2147483648
  %v150 = vor.u32 1.1754944e-38, %v149
  %v151 = vsel %vm148, %v150, %v146
  %v152 = vmul.f32 1.0, %v151
  %vm153 = vcmask 48128
  %154 = vst.msk [vmem:[%s4] sm:$0xff] %vm153, %v152
  %vm155 = vcmp.gt.f32.partialorder %v152, 0.5
  %v156 = vsel %vm155, 1.0, 0.0
  %157 = vst.msk [vmem:[%s5] sm:$0xff] %vm153, %v156
  // Predicated region
  $region18: #{encoder_forward.1} parent=0 // pred_check
    _
  $region19: #{encoder_forward.1} parent=0 // pred_check_branch
    %159 = sbr.rel (0) target = $region21
  $region20: #{encoder_forward.1} parent=0 // pred_region
    _
  $region21: #{encoder_forward.1} parent=0 // pred_fallthru
    _
  // Predicated region
  $region22: #{encoder_forward.1} parent=0 // pred_check
    _
  $region23: #{encoder_forward.1} parent=0 // pred_check_branch
    %161 = sbr.rel (0) target = $region25
  $region24: #{encoder_forward.1} parent=0 // pred_region
    _
  $region25: #{encoder_forward.1} parent=0 // pred_fallthru
    _
  // Predicated region
  $region26: #{encoder_forward.1} parent=0 // pred_check
    _
  $region27: #{encoder_forward.1} parent=0 // pred_check_branch
    %163 = sbr.rel (0) target = $region29
  $region28: #{encoder_forward.1} parent=0 // pred_region
    _
  $region29: #{encoder_forward.1} parent=0 // pred_fallthru
    _
  // Predicated region
  $region30: #{encoder_forward.1} parent=0 // pred_check
    _
  $region31: #{encoder_forward.1} parent=0 // pred_check_branch
    %165 = sbr.rel (0) target = $region33
  $region32: #{encoder_forward.1} parent=0 // pred_region
    _
  $region33: #{encoder_forward.1} parent=0 // pred_fallthru
    _

</llo_original>
